<compile_context>
chip_gen: v5e
topology: v5e:2x2
jax: 0.10.0
libtpu: 0.0.40
codegen_flags: <defaults>
</compile_context>

<pallas_src>
import functools

import jax
import jax.numpy as jnp
from jax.experimental import pallas as pl
from jax.experimental.pallas import tpu as pltpu


# ---------------------------------------------------------------------------
# GELU (exact / erf-based, matching nn.GELU() default)
# ---------------------------------------------------------------------------

_ERF_A1 = 0.254829592
_ERF_A2 = -0.284496736
_ERF_A3 = 1.421413741
_ERF_A4 = -1.453152027
_ERF_A5 = 1.061405429
_ERF_P = 0.3275911
_INV_SQRT2 = 0.7071067811865476


def _gelu_erf(x):
    """Exact (erf) GELU on an f32 tile.

    erf via A&S 7.1.26 on |x|; sign select folded away with the identity
    x*erf(x/sqrt(2)) == |x|*erf(|x|/sqrt(2)).  exp() and the approximate
    reciprocal execute on the EUP slot, keeping the VALU slots free.
    """
    ax = jnp.abs(x)
    a = ax * _INV_SQRT2
    t = pl.reciprocal(1.0 + _ERF_P * a, approx=True)
    poly = ((((_ERF_A5 * t + _ERF_A4) * t + _ERF_A3) * t + _ERF_A2) * t + _ERF_A1) * t
    erf_abs = 1.0 - poly * jnp.exp(-a * a)
    return 0.5 * x + 0.5 * ax * erf_abs


# ---------------------------------------------------------------------------
# Kernel: one (tm, C) row tile x one (th) hidden tile per grid step.
# Hidden dim further chunked statically (tc) inside the body.
# ---------------------------------------------------------------------------

def _mlp_kernel(x_ref, w1_ref, b1_ref, w2_ref, b2_ref, o_ref, acc_ref, *, tc):
    k = pl.program_id(1)

    @pl.when(k == 0)
    def _init():
        acc_ref[...] = jnp.zeros_like(acc_ref)

    xc = x_ref[...].astype(w1_ref.dtype)          # cast in-kernel: no HBM cast pass
    th = w1_ref.shape[1]
    for j in range(0, th, tc):                    # static chunks of the hidden dim
        h = jnp.dot(xc, w1_ref[:, j:j + tc], preferred_element_type=jnp.float32)
        h = _gelu_erf(h + b1_ref[:, j:j + tc])
        acc_ref[...] += jnp.dot(h.astype(w2_ref.dtype), w2_ref[j:j + tc, :],
                                preferred_element_type=jnp.float32)

    @pl.when(k == pl.num_programs(1) - 1)
    def _finalize():
        o_ref[...] = (acc_ref[...] + b2_ref[...]).astype(o_ref.dtype)


# ---------------------------------------------------------------------------
# Tile selection (generation-aware VMEM budget)
# ---------------------------------------------------------------------------

def _round_up(n, m):
    return ((n + m - 1) // m) * m


@functools.lru_cache(maxsize=None)
def _vmem_capacity_bytes():
    try:
        info = pltpu.get_tpu_info()
        for attr in ("vmem_capacity_bytes", "vmem_size_bytes", "vmem_bytes"):
            v = getattr(info, attr, None)
            if v:
                return int(v)
    except Exception:
        pass
    return 64 * 1024 * 1024  # conservative default (v7x per-TC VMEM)


def _largest_chunk(th, cap=1024):
    """Largest static hidden chunk: divides th, multiple of 128, <= cap."""
    if th <= cap:
        return th
    best = None
    for d in range(128, cap + 1, 128):
        if th % d == 0:
            best = d
    return best if best is not None else th


@functools.lru_cache(maxsize=None)
def _choose_tiles(M, C, H, tm_req, xbytes, wbytes, obytes):
    """Pick (tm, th, tc, vmem_limit) from the problem size + chip VMEM."""
    tm = max(8, min(_round_up(M, 8), _round_up(tm_req, 8)))

    capacity = _vmem_capacity_bytes()
    budget = int(0.85 * capacity)

    # Per-grid-step VMEM independent of the H tile: double-buffered x / out row
    # tiles, the f32 accumulator scratch, b2.
    fixed = tm * C * (2 * xbytes + 2 * obytes + 4) + 2 * C * 4

    def need(th, tc):
        weights = 2 * (C * th * wbytes) * 2   # W1 + W2 blocks, double-buffered
        bias1 = 2 * th * 4                    # b1 block, double-buffered
        hidden = tm * tc * 4                  # live f32 hidden chunk
        return fixed + weights + bias1 + hidden

    # Candidates: full H first (weights stay VMEM-resident across the grid),
    # then divisors of H that are multiples of 128, largest first.
    cands = sorted({H} | {d for d in range(128, H, 128) if H % d == 0},
                   reverse=True)
    th, tc = cands[-1], _largest_chunk(cands[-1])
    for cand in cands:
        cand_tc = _largest_chunk(cand)
        if need(cand, cand_tc) <= budget:
            th, tc = cand, cand_tc
            break

    vmem_limit = int(min(0.9 * capacity,
                         max(32 * 1024 * 1024, 1.3 * need(th, tc))))
    return tm, th, tc, vmem_limit


# ---------------------------------------------------------------------------
# pallas_call builder (cached per shape signature: no per-call rebuild)
# ---------------------------------------------------------------------------

@functools.lru_cache(maxsize=None)
def _build_mlp_call(M, C, H, tm, th, tc, xbytes, wbytes, out_dtype_name,
                    vmem_limit):
    num_m = pl.cdiv(M, tm)
    num_k = H // th
    out_dtype = jnp.dtype(out_dtype_name)

    weight_bytes = 2 * C * H * wbytes
    cost = pl.CostEstimate(
        flops=int(4 * M * C * H),
        transcendentals=int(2 * M * H),   # exp + approx reciprocal per hidden elem
        bytes_accessed=int(M * C * xbytes + M * C * out_dtype.itemsize
                           + weight_bytes * (num_m if num_k > 1 else 1)
                           + (H + C) * 4),
    )

    kernel = functools.partial(_mlp_kernel, tc=tc)

    return pl.pallas_call(
        kernel,
        out_shape=jax.ShapeDtypeStruct((M, C), out_dtype),
        grid=(num_m, num_k),
        in_specs=[
            pl.BlockSpec((tm, C), lambda i, k: (i, 0)),   # x row tile (native dtype)
            pl.BlockSpec((C, th), lambda i, k: (0, k)),   # W1 column block
            pl.BlockSpec((1, th), lambda i, k: (0, k)),   # b1 block
            pl.BlockSpec((th, C), lambda i, k: (k, 0)),   # W2 row block
            pl.BlockSpec((1, C), lambda i, k: (0, 0)),    # b2 (resident)
        ],
        out_specs=pl.BlockSpec((tm, C), lambda i, k: (i, 0)),
        scratch_shapes=[pltpu.VMEM((tm, C), jnp.float32)],
        compiler_params=pltpu.CompilerParams(
            dimension_semantics=("parallel", "arbitrary"),
            vmem_limit_bytes=vmem_limit,
        ),
        cost_estimate=cost,
    )


# ---------------------------------------------------------------------------
# Public wrapper (jit-safe; no block_until_ready / probing / per-call rebuild)
# ---------------------------------------------------------------------------

def mlp_pallas(x, w1, b1, w2, b2, *, tm=256, compute_dtype=jnp.bfloat16,
               out_dtype=None):
    """MLP forward: GELU(x @ W1 + b1) @ W2 + b2 (dropout = eval-mode identity).

    x: (B, T, C). w1: (C, H), b1: (H,), w2: (H, C), b2: (C,).
    x is streamed in its own dtype and cast to `compute_dtype` inside the
    kernel; weights are cast here (a no-op if already stored in that dtype,
    fused/folded under jit).  Accumulation, biases and GELU run in f32.
    Output dtype defaults to x.dtype (pass bf16 to halve the writeback stream
    on bandwidth-starved chips).
    """
    B, T, C = x.shape
    H = w1.shape[1]
    assert w1.shape == (C, H) and w2.shape == (H, C)
    assert b1.shape == (H,) and b2.shape == (C,)
    M = B * T
    out_dt = jnp.dtype(x.dtype if out_dtype is None else out_dtype)
    cdt = jnp.dtype(compute_dtype)

    tm_eff, th, tc, vmem_limit = _choose_tiles(
        M, C, H, tm, jnp.dtype(x.dtype).itemsize, cdt.itemsize, out_dt.itemsize)

    call = _build_mlp_call(M, C, H, tm_eff, th, tc,
                           jnp.dtype(x.dtype).itemsize, cdt.itemsize,
                           out_dt.name, vmem_limit)

    out = call(
        x.reshape(M, C),                       # no pad: partial last tile is masked
        w1.astype(cdt),
        b1.astype(jnp.float32).reshape(1, H),
        w2.astype(cdt),
        b2.astype(jnp.float32).reshape(1, C),
    )
    return out.reshape(B, T, C)


# ---------------------------------------------------------------------------
# Reference (same bf16 matmul-input precision as the kernel, f32 accumulation)
# ---------------------------------------------------------------------------

def _reference_mlp(x, w1, b1, w2, b2, compute_dtype=jnp.float32):
    B, T, C = x.shape
    xc = x.reshape(-1, C).astype(compute_dtype)
    h = jnp.dot(xc, w1.astype(compute_dtype),
                preferred_element_type=jnp.float32) + b1.astype(jnp.float32)
    h = jax.nn.gelu(h, approximate=False)
    o = jnp.dot(h.astype(compute_dtype), w2.astype(compute_dtype),
                preferred_element_type=jnp.float32) + b2.astype(jnp.float32)
    return o.reshape(B, T, C).astype(x.dtype)  # dropout is identity in eval mode


if __name__ == "__main__":
    n_embd = 128
    dense_multiplier = 4
    hidden = int(dense_multiplier * n_embd)
    B, T = 2, 8

    key = jax.random.PRNGKey(0)
    kx, k1, k2, k3, k4 = jax.random.split(key, 5)

    # PyTorch nn.Linear default init: U(-1/sqrt(fan_in), +1/sqrt(fan_in)).
    bound1 = 1.0 / (n_embd ** 0.5)
    bound2 = 1.0 / (hidden ** 0.5)
    w1 = jax.random.uniform(k1, (n_embd, hidden), jnp.float32, -bound1, bound1)
    b1 = jax.random.uniform(k2, (hidden,), jnp.float32, -bound1, bound1)
    w2 = jax.random.uniform(k3, (hidden, n_embd), jnp.float32, -bound2, bound2)
    b2 = jax.random.uniform(k4, (n_embd,), jnp.float32, -bound2, bound2)

    x = jax.random.normal(kx, (B, T, n_embd), jnp.float32)

    mlp = jax.jit(mlp_pallas)  # jit-safe: weight casts fuse, pallas_call cached
    out = jax.block_until_ready(mlp(x, w1, b1, w2, b2))

    # Compare against a reference using the same bf16 matmul-input precision.
    ref = _reference_mlp(x, w1, b1, w2, b2, compute_dtype=jnp.bfloat16)
    assert out.shape == (B, T, n_embd)
    max_err = float(jnp.max(jnp.abs(out - ref)))
    assert jnp.allclose(out, ref, atol=5e-3, rtol=5e-2), max_err

    print("KERNEL_OK")
</pallas_src>

<mosaic_0001>
module attributes {stable_mosaic.version = 11 : i64} {
  func.func @_mlp_kernel(%arg0: i32, %arg1: i32, %arg2: memref<16x128xf32, #tpu.memory_space<vmem>>, %arg3: memref<128x512xbf16, #tpu.memory_space<vmem>>, %arg4: memref<1x512xf32, #tpu.memory_space<vmem>>, %arg5: memref<512x128xbf16, #tpu.memory_space<vmem>>, %arg6: memref<1x128xf32, #tpu.memory_space<vmem>>, %arg7: memref<16x128xf32, #tpu.memory_space<vmem>>, %arg8: memref<16x128xf32, #tpu.memory_space<vmem>>) attributes {dimension_semantics = [#tpu.dimension_semantics<parallel>, #tpu.dimension_semantics<arbitrary>], iteration_bounds = array<i64: 1, 1>, scalar_prefetch = 0 : i64, scratch_operands = 1 : i64, tpu.core_type = #tpu.core_type<tc>, window_params = [{transform_indices = @transform_0, window_bounds = array<i64: 16, 128>}, {transform_indices = @transform_1, window_bounds = array<i64: 128, 512>}, {transform_indices = @transform_2, window_bounds = array<i64: 1, 512>}, {transform_indices = @transform_3, window_bounds = array<i64: 512, 128>}, {pipeline_mode = #tpu.pipeline_mode<synchronous>, transform_indices = @transform_4, window_bounds = array<i64: 1, 128>}, {transform_indices = @transform_5, window_bounds = array<i64: 16, 128>}]} {
    %c0_i32 = arith.constant 0 : i32
    %0 = arith.cmpi eq, %arg1, %c0_i32 : i32
    %1 = arith.extui %0 : i1 to i32
    %c0_i32_0 = arith.constant 0 : i32
    %2 = arith.cmpi ne, %1, %c0_i32_0 : i32
    scf.if %2 {
      %cst_27 = arith.constant 0.000000e+00 : f32
      %54 = vector.broadcast %cst_27 : f32 to vector<16x128xf32>
      %c0_28 = arith.constant 0 : index
      %c0_29 = arith.constant 0 : index
      %55 = vector.load %arg8[%c0_28, %c0_29] : memref<16x128xf32, #tpu.memory_space<vmem>>, vector<16x128xf32>
      tpu.vector_store %arg8[%c0_28, %c0_29], %54 {strides = array<i32>} : memref<16x128xf32, #tpu.memory_space<vmem>>, vector<16x128xf32>,
    } else {
    }
    %c0 = arith.constant 0 : index
    %c0_1 = arith.constant 0 : index
    %3 = vector.load %arg2[%c0, %c0_1] : memref<16x128xf32, #tpu.memory_space<vmem>>, vector<16x128xf32>
    %4 = arith.truncf %3 : vector<16x128xf32> to vector<16x128xbf16>
    %c0_2 = arith.constant 0 : index
    %c0_3 = arith.constant 0 : index
    %5 = vector.load %arg3[%c0_2, %c0_3] : memref<128x512xbf16, #tpu.memory_space<vmem>>, vector<128x512xbf16>
    %cst = arith.constant dense<0.000000e+00> : vector<16x512xf32>
    %6 = tpu.matmul %4, %5, %cst {dimension_numbers = #tpu.dot_dimension_numbers<[1], [0], [0], [1], [0, 0, 1, 1], [], []>} : vector<16x128xbf16>, vector<128x512xbf16>, vector<16x512xf32> -> vector<16x512xf32>
    %c0_4 = arith.constant 0 : index
    %c0_5 = arith.constant 0 : index
    %7 = vector.load %arg4[%c0_4, %c0_5] : memref<1x512xf32, #tpu.memory_space<vmem>>, vector<1x512xf32>
    %8 = vector.broadcast %7 : vector<1x512xf32> to vector<16x512xf32>
    %9 = arith.addf %6, %8 : vector<16x512xf32>
    %10 = math.absf %9 : vector<16x512xf32>
    %cst_6 = arith.constant 0.707106769 : f32
    %11 = vector.broadcast %cst_6 : f32 to vector<16x512xf32>
    %12 = arith.mulf %10, %11 : vector<16x512xf32>
    %cst_7 = arith.constant 0.327591091 : f32
    %13 = vector.broadcast %cst_7 : f32 to vector<16x512xf32>
    %14 = arith.mulf %13, %12 : vector<16x512xf32>
    %cst_8 = arith.constant 1.000000e+00 : f32
    %15 = vector.broadcast %cst_8 : f32 to vector<16x512xf32>
    %16 = arith.addf %15, %14 : vector<16x512xf32>
    %17 = tpu.reciprocal %16 {approx = true} : vector<16x512xf32> -> vector<16x512xf32>
    %cst_9 = arith.constant 1.06140542 : f32
    %18 = vector.broadcast %cst_9 : f32 to vector<16x512xf32>
    %19 = arith.mulf %18, %17 : vector<16x512xf32>
    %cst_10 = arith.constant -1.45315206 : f32
    %20 = vector.broadcast %cst_10 : f32 to vector<16x512xf32>
    %21 = arith.addf %19, %20 : vector<16x512xf32>
    %22 = arith.mulf %21, %17 : vector<16x512xf32>
    %cst_11 = arith.constant 1.42141378 : f32
    %23 = vector.broadcast %cst_11 : f32 to vector<16x512xf32>
    %24 = arith.addf %22, %23 : vector<16x512xf32>
    %25 = arith.mulf %24, %17 : vector<16x512xf32>
    %cst_12 = arith.constant -0.284496725 : f32
    %26 = vector.broadcast %cst_12 : f32 to vector<16x512xf32>
    %27 = arith.addf %25, %26 : vector<16x512xf32>
    %28 = arith.mulf %27, %17 : vector<16x512xf32>
    %cst_13 = arith.constant 0.254829586 : f32
    %29 = vector.broadcast %cst_13 : f32 to vector<16x512xf32>
    %30 = arith.addf %28, %29 : vector<16x512xf32>
    %31 = arith.mulf %30, %17 : vector<16x512xf32>
    %cst_14 = arith.constant 0.000000e+00 : f32
    %32 = vector.broadcast %cst_14 : f32 to vector<16x512xf32>
    %33 = arith.subf %32, %12 : vector<16x512xf32>
    %34 = arith.mulf %33, %12 : vector<16x512xf32>
    %35 = math.exp %34 : vector<16x512xf32>
    %36 = arith.mulf %31, %35 : vector<16x512xf32>
    %cst_15 = arith.constant 1.000000e+00 : f32
    %37 = vector.broadcast %cst_15 : f32 to vector<16x512xf32>
    %38 = arith.subf %37, %36 : vector<16x512xf32>
    %cst_16 = arith.constant 5.000000e-01 : f32
    %39 = vector.broadcast %cst_16 : f32 to vector<16x512xf32>
    %40 = arith.mulf %39, %9 : vector<16x512xf32>
    %cst_17 = arith.constant 5.000000e-01 : f32
    %41 = vector.broadcast %cst_17 : f32 to vector<16x512xf32>
    %42 = arith.mulf %41, %10 : vector<16x512xf32>
    %43 = arith.mulf %42, %38 : vector<16x512xf32>
    %44 = arith.addf %40, %43 : vector<16x512xf32>
    %c0_18 = arith.constant 0 : index
    %c0_19 = arith.constant 0 : index
    %45 = vector.load %arg8[%c0_18, %c0_19] : memref<16x128xf32, #tpu.memory_space<vmem>>, vector<16x128xf32>
    %46 = arith.truncf %44 : vector<16x512xf32> to vector<16x512xbf16>
    %c0_20 = arith.constant 0 : index
    %c0_21 = arith.constant 0 : index
    %47 = vector.load %arg5[%c0_20, %c0_21] : memref<512x128xbf16, #tpu.memory_space<vmem>>, vector<512x128xbf16>
    %cst_22 = arith.constant dense<0.000000e+00> : vector<16x128xf32>
    %48 = tpu.matmul %46, %47, %cst_22 {dimension_numbers = #tpu.dot_dimension_numbers<[1], [0], [0], [1], [0, 0, 1, 1], [], []>} : vector<16x512xbf16>, vector<512x128xbf16>, vector<16x128xf32> -> vector<16x128xf32>
    %49 = arith.addf %45, %48 : vector<16x128xf32>
    %c0_23 = arith.constant 0 : index
    %c0_24 = arith.constant 0 : index
    %50 = vector.load %arg8[%c0_23, %c0_24] : memref<16x128xf32, #tpu.memory_space<vmem>>, vector<16x128xf32>
    tpu.vector_store %arg8[%c0_23, %c0_24], %49 {strides = array<i32>} : memref<16x128xf32, #tpu.memory_space<vmem>>, vector<16x128xf32>,
    %c0_i32_25 = arith.constant 0 : i32
    %51 = arith.cmpi eq, %arg1, %c0_i32_25 : i32
    %52 = arith.extui %51 : i1 to i32
    %c0_i32_26 = arith.constant 0 : i32
    %53 = arith.cmpi ne, %52, %c0_i32_26 : i32
    scf.if %53 {
      %c0_27 = arith.constant 0 : index
      %c0_28 = arith.constant 0 : index
      %54 = vector.load %arg8[%c0_27, %c0_28] : memref<16x128xf32, #tpu.memory_space<vmem>>, vector<16x128xf32>
      %c0_29 = arith.constant 0 : index
      %c0_30 = arith.constant 0 : index
      %55 = vector.load %arg6[%c0_29, %c0_30] : memref<1x128xf32, #tpu.memory_space<vmem>>, vector<1x128xf32>
      %56 = vector.broadcast %55 : vector<1x128xf32> to vector<16x128xf32>
      %57 = arith.addf %54, %56 : vector<16x128xf32>
      %c0_31 = arith.constant 0 : index
      %c0_32 = arith.constant 0 : index
      %58 = vector.load %arg7[%c0_31, %c0_32] : memref<16x128xf32, #tpu.memory_space<vmem>>, vector<16x128xf32>
      tpu.vector_store %arg7[%c0_31, %c0_32], %57 {strides = array<i32>} : memref<16x128xf32, #tpu.memory_space<vmem>>, vector<16x128xf32>,
    } else {
    }
    return
  }
  func.func @transform_0(%arg0: i32, %arg1: i32) -> (i32, i32) {
    %c0_i32 = arith.constant 0 : i32
    %c0_i32_0 = arith.constant 0 : i32
    return %arg0, %c0_i32 : i32, i32
  }
  func.func @transform_1(%arg0: i32, %arg1: i32) -> (i32, i32) {
    %c0_i32 = arith.constant 0 : i32
    %c0_i32_0 = arith.constant 0 : i32
    return %c0_i32, %arg1 : i32, i32
  }
  func.func @transform_2(%arg0: i32, %arg1: i32) -> (i32, i32) {
    %c0_i32 = arith.constant 0 : i32
    %c0_i32_0 = arith.constant 0 : i32
    return %c0_i32, %arg1 : i32, i32
  }
  func.func @transform_3(%arg0: i32, %arg1: i32) -> (i32, i32) {
    %c0_i32 = arith.constant 0 : i32
    %c0_i32_0 = arith.constant 0 : i32
    return %arg1, %c0_i32 : i32, i32
  }
  func.func @transform_4(%arg0: i32, %arg1: i32) -> (i32, i32) {
    %c0_i32 = arith.constant 0 : i32
    %c0_i32_0 = arith.constant 0 : i32
    %c0_i32_1 = arith.constant 0 : i32
    return %c0_i32, %c0_i32_0 : i32, i32
  }
  func.func @transform_5(%arg0: i32, %arg1: i32) -> (i32, i32) {
    %c0_i32 = arith.constant 0 : i32
    %c0_i32_0 = arith.constant 0 : i32
    return %arg0, %c0_i32 : i32, i32
  }
}

</mosaic_0001>

<llo_original>
// kernel: mlp_pallas.1
$region0: #{mlp_pallas.1}
  #allocation0 [shape = 'u32[]', space=smem, size = 0x4, offset = 0x4, fixed_abs, tag = 'smem constant byte address 0x4 - core index']
  #allocation1 [shape = 'u32[72,128]{1,0:T(1,128)}', space=vmem, size = 0x9000, scoped, tag = 'internal scratch']
  #allocation2 [shape = 'f32[16,128]{1,0:T(8,128)}', space=vmem, size = 0x2000, scoped, tag = 'scratch operand']
  %s0 = inlined_call_operand.vmem [shape: f32[16,128], index: 0, kind: input, shape index: {}]
  %s1 = inlined_call_operand.vmem [shape: bf16[128,512], index: 1, kind: input, shape index: {}]
  %s2 = inlined_call_operand.vmem [shape: f32[1,512], index: 2, kind: input, shape index: {}]
  %s3 = inlined_call_operand.vmem [shape: bf16[512,128], index: 3, kind: input, shape index: {}]
  %s4 = inlined_call_operand.vmem [shape: f32[1,128], index: 4, kind: input, shape index: {}]
  %s5 = inlined_call_operand.hbm [shape: f32[16,128], index: 5, kind: output, shape index: {}]
  %s6 = sld [smem:[#allocation0]]
  $region38: #{mlp_pallas.1} parent=0
    _
  %s8 = ssub.s32 1, %s6
  %s9 = scalar_select 0, %s8, %s6
  $region1: #{mlp_pallas.1} parent=0
    #allocation3 [shape = 'u8[8192]{0}', space=vmem, size = 0x2000, scoped, tag = 'output window, operand 0, single buffered']
    #allocation4 [shape = 's32[1]{0}', space=sflag, size = 0x4, scoped, tag = 'scoped memory for mlp_pallas.1']
    %10 = vsyncpa [#allocation4], 0
    // Predicated region
    $region2: #{mlp_pallas.1} parent=1 // pred_check
      _
    $region3: #{mlp_pallas.1} parent=1 // pred_check_branch
      %12 = sbr.rel (0) target = $region5
    $region4: #{mlp_pallas.1} parent=1 // pred_region
      _
    $region5: #{mlp_pallas.1} parent=1 // pred_fallthru
      _
    // Predicated region
    $region6: #{mlp_pallas.1} parent=1 // pred_check
      _
    $region7: #{mlp_pallas.1} parent=1 // pred_check_branch
      %14 = sbr.rel (0) target = $region9
    $region8: #{mlp_pallas.1} parent=1 // pred_region
      _
    $region9: #{mlp_pallas.1} parent=1 // pred_fallthru
      _
    // Predicated region
    $region10: #{mlp_pallas.1} parent=1 // pred_check
      _
    $region11: #{mlp_pallas.1} parent=1 // pred_check_branch
      %16 = sbr.rel (0) target = $region13
    $region12: #{mlp_pallas.1} parent=1 // pred_region
      _
    $region13: #{mlp_pallas.1} parent=1 // pred_fallthru
      _
    // Predicated region
    $region14: #{mlp_pallas.1} parent=1 // pred_check
      _
    $region15: #{mlp_pallas.1} parent=1 // pred_check_branch
      %18 = sbr.rel (0) target = $region17
    $region16: #{mlp_pallas.1} parent=1 // pred_region
      _
    $region17: #{mlp_pallas.1} parent=1 // pred_fallthru
      _
    // Predicated region
    $region18: #{mlp_pallas.1} parent=1 // pred_check
      _
    $region19: #{mlp_pallas.1} parent=1 // pred_check_branch
      %20 = sbr.rel (0) target = $region21
    $region20: #{mlp_pallas.1} parent=1 // pred_region
      _
    $region21: #{mlp_pallas.1} parent=1 // pred_fallthru
      _
    %p21 = scmp.eq.s32.totalorder 0, 0
    // Predicated region
    $region22: #{mlp_pallas.1} parent=1 // pred_check
      %p22 = pneg %p21
    $region23: #{mlp_pallas.1} parent=1 // pred_check_branch
      %24 = sbr.rel (%p22) target = $region25
    $region24: #{mlp_pallas.1} parent=1 // pred_region
      %25 = vst [vmem:[#allocation2] sm:$0xff] 0.0
      %26 = vst [vmem:[#allocation2 + $0x8] sm:$0xff] 0.0
    $region25: #{mlp_pallas.1} parent=1 // pred_fallthru
      _
    %v27 = vld [vmem:[%s0] sm:$0xff]
    %v28 = vld [vmem:[%s0 + $0x8] sm:$0xff]
    %v29 = vpack.c.bf16 %v28, %v27
    %v30 = vld [vmem:[%s1] sm:$0xff]
    %v31 = vld [vmem:[%s1 + $0x8] sm:$0xff]
    %v32 = vld [vmem:[%s1 + $0x10] sm:$0xff]
    %v33 = vld [vmem:[%s1 + $0x18] sm:$0xff]
    %v34 = vld [vmem:[%s1 + $0x20] sm:$0xff]
    %v35 = vld [vmem:[%s1 + $0x28] sm:$0xff]
    %v36 = vld [vmem:[%s1 + $0x30] sm:$0xff]
    %v37 = vld [vmem:[%s1 + $0x38] sm:$0xff]
    %v38 = vld [vmem:[%s1 + $0x40] sm:$0xff]
    %v39 = vld [vmem:[%s1 + $0x48] sm:$0xff]
    %v40 = vld [vmem:[%s1 + $0x50] sm:$0xff]
    %v41 = vld [vmem:[%s1 + $0x58] sm:$0xff]
    %v42 = vld [vmem:[%s1 + $0x60] sm:$0xff]
    %v43 = vld [vmem:[%s1 + $0x68] sm:$0xff]
    %v44 = vld [vmem:[%s1 + $0x70] sm:$0xff]
    %v45 = vld [vmem:[%s1 + $0x78] sm:$0xff]
    %v46 = vld [vmem:[%s1 + $0x80] sm:$0xff]
    %v47 = vld [vmem:[%s1 + $0x88] sm:$0xff]
    %v48 = vld [vmem:[%s1 + $0x90] sm:$0xff]
    %v49 = vld [vmem:[%s1 + $0x98] sm:$0xff]
    %v50 = vld [vmem:[%s1 + $0xa0] sm:$0xff]
    %v51 = vld [vmem:[%s1 + $0xa8] sm:$0xff]
    %v52 = vld [vmem:[%s1 + $0xb0] sm:$0xff]
    %v53 = vld [vmem:[%s1 + $0xb8] sm:$0xff]
    %v54 = vld [vmem:[%s1 + $0xc0] sm:$0xff]
    %v55 = vld [vmem:[%s1 + $0xc8] sm:$0xff]
    %v56 = vld [vmem:[%s1 + $0xd0] sm:$0xff]
    %v57 = vld [vmem:[%s1 + $0xd8] sm:$0xff]
    %v58 = vld [vmem:[%s1 + $0xe0] sm:$0xff]
    %v59 = vld [vmem:[%s1 + $0xe8] sm:$0xff]
    %v60 = vld [vmem:[%s1 + $0xf0] sm:$0xff]
    %v61 = vld [vmem:[%s1 + $0xf8] sm:$0xff]
    %v62 = vld [vmem:[%s2] sm:$0xf]
    %v64 = vperm.slane %v62, 0
    %v65 = vperm.slane %v62, 1
    %v66 = vperm.slane %v62, 2
    %v67 = vperm.slane %v62, 3
    %v104 = vunpack.c.l.b16 %v30
    %v105 = vunpack.c.h.b16 %v30
    %v106 = vunpack.c.l.b16 %v31
    %v107 = vunpack.c.h.b16 %v31
    %v108 = vunpack.c.l.b16 %v32
    %v109 = vunpack.c.h.b16 %v32
    %v110 = vunpack.c.l.b16 %v33
    %v111 = vunpack.c.h.b16 %v33
    %v112 = vunpack.c.l.b16 %v34
    %v113 = vunpack.c.h.b16 %v34
    %v114 = vunpack.c.l.b16 %v35
    %v115 = vunpack.c.h.b16 %v35
    %v116 = vunpack.c.l.b16 %v36
    %v117 = vunpack.c.h.b16 %v36
    %v118 = vunpack.c.l.b16 %v37
    %v119 = vunpack.c.h.b16 %v37
    %v120 = vunpack.c.l.b16 %v38
    %v121 = vunpack.c.h.b16 %v38
    %v122 = vunpack.c.l.b16 %v39
    %v123 = vunpack.c.h.b16 %v39
    %v124 = vunpack.c.l.b16 %v40
    %v125 = vunpack.c.h.b16 %v40
    %v126 = vunpack.c.l.b16 %v41
    %v127 = vunpack.c.h.b16 %v41
    %v128 = vunpack.c.l.b16 %v42
    %v129 = vunpack.c.h.b16 %v42
    %v130 = vunpack.c.l.b16 %v43
    %v131 = vunpack.c.h.b16 %v43
    %v132 = vunpack.c.l.b16 %v44
    %v133 = vunpack.c.h.b16 %v44
    %v134 = vunpack.c.l.b16 %v45
    %v135 = vunpack.c.h.b16 %v45
    %v136 = vunpack.c.l.b16 %v46
    %v137 = vunpack.c.h.b16 %v46
    %v138 = vunpack.c.l.b16 %v47
    %v139 = vunpack.c.h.b16 %v47
    %v140 = vunpack.c.l.b16 %v48
    %v141 = vunpack.c.h.b16 %v48
    %v142 = vunpack.c.l.b16 %v49
    %v143 = vunpack.c.h.b16 %v49
    %v144 = vunpack.c.l.b16 %v50
    %v145 = vunpack.c.h.b16 %v50
    %v146 = vunpack.c.l.b16 %v51
    %v147 = vunpack.c.h.b16 %v51
    %v148 = vunpack.c.l.b16 %v52
    %v149 = vunpack.c.h.b16 %v52
    %v150 = vunpack.c.l.b16 %v53
    %v151 = vunpack.c.h.b16 %v53
    %v152 = vunpack.c.l.b16 %v54
    %v153 = vunpack.c.h.b16 %v54
    %v154 = vunpack.c.l.b16 %v55
    %v155 = vunpack.c.h.b16 %v55
    %v156 = vunpack.c.l.b16 %v56
    %v157 = vunpack.c.h.b16 %v56
    %v158 = vunpack.c.l.b16 %v57
    %v159 = vunpack.c.h.b16 %v57
    %v160 = vunpack.c.l.b16 %v58
    %v161 = vunpack.c.h.b16 %v58
    %v162 = vunpack.c.l.b16 %v59
    %v163 = vunpack.c.h.b16 %v59
    %v164 = vunpack.c.l.b16 %v60
    %v165 = vunpack.c.h.b16 %v60
    %v166 = vunpack.c.l.b16 %v61
    %v167 = vunpack.c.h.b16 %v61
    %v168 = vpack.c.b16 %v108, %v104
    %v169 = vpack.c.b16 %v109, %v105
    %v170 = vpack.c.b16 %v110, %v106
    %v171 = vpack.c.b16 %v111, %v107
    %v172 = vpack.c.b16 %v116, %v112
    %v173 = vpack.c.b16 %v117, %v113
    %v174 = vpack.c.b16 %v118, %v114
    %v175 = vpack.c.b16 %v119, %v115
    %v176 = vpack.c.b16 %v124, %v120
    %v177 = vpack.c.b16 %v125, %v121
    %v178 = vpack.c.b16 %v126, %v122
    %v179 = vpack.c.b16 %v127, %v123
    %v180 = vpack.c.b16 %v132, %v128
    %v181 = vpack.c.b16 %v133, %v129
    %v182 = vpack.c.b16 %v134, %v130
    %v183 = vpack.c.b16 %v135, %v131
    %v184 = vpack.c.b16 %v140, %v136
    %v185 = vpack.c.b16 %v141, %v137
    %v186 = vpack.c.b16 %v142, %v138
    %v187 = vpack.c.b16 %v143, %v139
    %v188 = vpack.c.b16 %v148, %v144
    %v189 = vpack.c.b16 %v149, %v145
    %v190 = vpack.c.b16 %v150, %v146
    %v191 = vpack.c.b16 %v151, %v147
    %v192 = vpack.c.b16 %v156, %v152
    %v193 = vpack.c.b16 %v157, %v153
    %v194 = vpack.c.b16 %v158, %v154
    %v195 = vpack.c.b16 %v159, %v155
    %v196 = vpack.c.b16 %v164, %v160
    %v197 = vpack.c.b16 %v165, %v161
    %v198 = vpack.c.b16 %v166, %v162
    %v199 = vpack.c.b16 %v167, %v163
    %232 = vmatpush.bf16.msra.mxu0 %v196
    %233 = vmatpush.bf16.msra.mxu0 %v192
    %234 = vmatpush.bf16.msra.mxu0 %v188
    %235 = vmatpush.bf16.msra.mxu0 %v184
    %236 = vmatpush.bf16.msra.mxu0 %v180
    %237 = vmatpush.bf16.msra.mxu0 %v176
    %238 = vmatpush.bf16.msra.mxu0 %v172
    %239 = vmatpush.bf16.msra.mxu0 %v168
    %240 = vmatmul.bf16.gmra.mxu0 %v29
    %v241 = vpop.f32.mrf.mxu0
    %v242 = vadd.f32 %v64, %v241
    %v243 = vpop.f32.mrf.mxu0
    %v244 = vadd.f32 %v64, %v243
    %245 = vdwg.mxu0
    %246 = vmatpush.bf16.msra.mxu0 %v197
    %247 = vmatpush.bf16.msra.mxu0 %v193
    %248 = vmatpush.bf16.msra.mxu0 %v189
    %249 = vmatpush.bf16.msra.mxu0 %v185
    %250 = vmatpush.bf16.msra.mxu0 %v181
    %251 = vmatpush.bf16.msra.mxu0 %v177
    %252 = vmatpush.bf16.msra.mxu0 %v173
    %253 = vmatpush.bf16.msra.mxu0 %v169
    %254 = vmatmul.bf16.gmra.mxu0 %v29
    %v255 = vpop.f32.mrf.mxu0
    %v256 = vadd.f32 %v65, %v255
    %v257 = vpop.f32.mrf.mxu0
    %v258 = vadd.f32 %v65, %v257
    %259 = vdwg.mxu0
    %260 = vmatpush.bf16.msra.mxu0 %v198
    %261 = vmatpush.bf16.msra.mxu0 %v194
    %262 = vmatpush.bf16.msra.mxu0 %v190
    %263 = vmatpush.bf16.msra.mxu0 %v186
    %264 = vmatpush.bf16.msra.mxu0 %v182
    %265 = vmatpush.bf16.msra.mxu0 %v178
    %266 = vmatpush.bf16.msra.mxu0 %v174
    %267 = vmatpush.bf16.msra.mxu0 %v170
    %268 = vmatmul.bf16.gmra.mxu0 %v29
    %v269 = vpop.f32.mrf.mxu0
    %v270 = vadd.f32 %v66, %v269
    %v271 = vpop.f32.mrf.mxu0
    %v272 = vadd.f32 %v66, %v271
    %273 = vdwg.mxu0
    %274 = vmatpush.bf16.msra.mxu0 %v199
    %275 = vmatpush.bf16.msra.mxu0 %v195
    %276 = vmatpush.bf16.msra.mxu0 %v191
    %277 = vmatpush.bf16.msra.mxu0 %v187
    %278 = vmatpush.bf16.msra.mxu0 %v183
    %279 = vmatpush.bf16.msra.mxu0 %v179
    %280 = vmatpush.bf16.msra.mxu0 %v175
    %281 = vmatpush.bf16.msra.mxu0 %v171
    %282 = vmatmul.bf16.gmra.mxu0 %v29
    %v283 = vpop.f32.mrf.mxu0
    %v284 = vadd.f32 %v67, %v283
    %v285 = vpop.f32.mrf.mxu0
    %v286 = vadd.f32 %v67, %v285
    %287 = vdwg.mxu0
    %v288 = vand.u32 2147483647, %v242
    %v289 = vand.u32 2147483647, %v256
    %v290 = vand.u32 2147483647, %v270
    %v291 = vand.u32 2147483647, %v284
    %v292 = vand.u32 2147483647, %v244
    %v293 = vand.u32 2147483647, %v258
    %v294 = vand.u32 2147483647, %v272
    %v295 = vand.u32 2147483647, %v286
    %v296 = vmul.f32 %v288, 0.70710677
    %v297 = vmul.f32 %v289, 0.70710677
    %v298 = vmul.f32 %v290, 0.70710677
    %v299 = vmul.f32 %v291, 0.70710677
    %v300 = vmul.f32 %v292, 0.70710677
    %v301 = vmul.f32 %v293, 0.70710677
    %v302 = vmul.f32 %v294, 0.70710677
    %v303 = vmul.f32 %v295, 0.70710677
    %v304 = vmul.f32 %v296, 0.3275911
    %v305 = vmul.f32 %v297, 0.3275911
    %v306 = vmul.f32 %v298, 0.3275911
    %v307 = vmul.f32 %v299, 0.3275911
    %v308 = vmul.f32 %v300, 0.3275911
    %v309 = vmul.f32 %v301, 0.3275911
    %v310 = vmul.f32 %v302, 0.3275911
    %v311 = vmul.f32 %v303, 0.3275911
    %v312 = vadd.f32 %v304, 1.0
    %v313 = vadd.f32 %v305, 1.0
    %v314 = vadd.f32 %v306, 1.0
    %v315 = vadd.f32 %v307, 1.0
    %v316 = vadd.f32 %v308, 1.0
    %v317 = vadd.f32 %v309, 1.0
    %v318 = vadd.f32 %v310, 1.0
    %v319 = vadd.f32 %v311, 1.0
    %v320 = vrcp.pop %v312
    %v321 = vrcp.pop %v313
    %v322 = vrcp.pop %v314
    %v323 = vrcp.pop %v315
    %v324 = vrcp.pop %v316
    %v325 = vrcp.pop %v317
    %v326 = vrcp.pop %v318
    %v327 = vrcp.pop %v319
    %v328 = vmul.f32 %v320, 1.0614054
    %v329 = vmul.f32 %v321, 1.0614054
    %v330 = vmul.f32 %v322, 1.0614054
    %v331 = vmul.f32 %v323, 1.0614054
    %v332 = vmul.f32 %v324, 1.0614054
    %v333 = vmul.f32 %v325, 1.0614054
    %v334 = vmul.f32 %v326, 1.0614054
    %v335 = vmul.f32 %v327, 1.0614054
    %v336 = vadd.f32 %v328, -1.4531521
    %v337 = vadd.f32 %v329, -1.4531521
    %v338 = vadd.f32 %v330, -1.4531521
    %v339 = vadd.f32 %v331, -1.4531521
    %v340 = vadd.f32 %v332, -1.4531521
    %v341 = vadd.f32 %v333, -1.4531521
    %v342 = vadd.f32 %v334, -1.4531521
    %v343 = vadd.f32 %v335, -1.4531521
    %v344 = vmul.f32 %v336, %v320
    %v345 = vmul.f32 %v337, %v321
    %v346 = vmul.f32 %v338, %v322
    %v347 = vmul.f32 %v339, %v323
    %v348 = vmul.f32 %v340, %v324
    %v349 = vmul.f32 %v341, %v325
    %v350 = vmul.f32 %v342, %v326
    %v351 = vmul.f32 %v343, %v327
    %v352 = vadd.f32 %v344, 1.4214138
    %v353 = vadd.f32 %v345, 1.4214138
    %v354 = vadd.f32 %v346, 1.4214138
    %v355 = vadd.f32 %v347, 1.4214138
    %v356 = vadd.f32 %v348, 1.4214138
    %v357 = vadd.f32 %v349, 1.4214138
    %v358 = vadd.f32 %v350, 1.4214138
    %v359 = vadd.f32 %v351, 1.4214138
    %v360 = vmul.f32 %v352, %v320
    %v361 = vmul.f32 %v353, %v321
    %v362 = vmul.f32 %v354, %v322
    %v363 = vmul.f32 %v355, %v323
    %v364 = vmul.f32 %v356, %v324
    %v365 = vmul.f32 %v357, %v325
    %v366 = vmul.f32 %v358, %v326
    %v367 = vmul.f32 %v359, %v327
    %v368 = vadd.f32 %v360, -0.28449672
    %v369 = vadd.f32 %v361, -0.28449672
    %v370 = vadd.f32 %v362, -0.28449672
    %v371 = vadd.f32 %v363, -0.28449672
    %v372 = vadd.f32 %v364, -0.28449672
    %v373 = vadd.f32 %v365, -0.28449672
    %v374 = vadd.f32 %v366, -0.28449672
    %v375 = vadd.f32 %v367, -0.28449672
    %v376 = vmul.f32 %v368, %v320
    %v377 = vmul.f32 %v369, %v321
    %v378 = vmul.f32 %v370, %v322
    %v379 = vmul.f32 %v371, %v323
    %v380 = vmul.f32 %v372, %v324
    %v381 = vmul.f32 %v373, %v325
    %v382 = vmul.f32 %v374, %v326
    %v383 = vmul.f32 %v375, %v327
    %v384 = vadd.f32 %v376, 0.2548296
    %v385 = vadd.f32 %v377, 0.2548296
    %v386 = vadd.f32 %v378, 0.2548296
    %v387 = vadd.f32 %v379, 0.2548296
    %v388 = vadd.f32 %v380, 0.2548296
    %v389 = vadd.f32 %v381, 0.2548296
    %v390 = vadd.f32 %v382, 0.2548296
    %v391 = vadd.f32 %v383, 0.2548296
    %v392 = vmul.f32 %v384, %v320
    %v393 = vmul.f32 %v385, %v321
    %v394 = vmul.f32 %v386, %v322
    %v395 = vmul.f32 %v387, %v323
    %v396 = vmul.f32 %v388, %v324
    %v397 = vmul.f32 %v389, %v325
    %v398 = vmul.f32 %v390, %v326
    %v399 = vmul.f32 %v391, %v327
    %v400 = vsub.f32 0.0, %v296
    %v401 = vsub.f32 0.0, %v297
    %v402 = vsub.f32 0.0, %v298
    %v403 = vsub.f32 0.0, %v299
    %v404 = vsub.f32 0.0, %v300
    %v405 = vsub.f32 0.0, %v301
    %v406 = vsub.f32 0.0, %v302
    %v407 = vsub.f32 0.0, %v303
    %v408 = vmul.f32 %v400, %v296
    %v409 = vmul.f32 %v401, %v297
    %v410 = vmul.f32 %v402, %v298
    %v411 = vmul.f32 %v403, %v299
    %v412 = vmul.f32 %v404, %v300
    %v413 = vmul.f32 %v405, %v301
    %v414 = vmul.f32 %v406, %v302
    %v415 = vmul.f32 %v407, %v303
    %v416 = vmul.f32 %v408, 1.442695
    %v417 = vpow.pop %v416
    %v418 = vmul.f32 %v409, 1.442695
    %v419 = vpow.pop %v418
    %v420 = vmul.f32 %v410, 1.442695
    %v421 = vpow.pop %v420
    %v422 = vmul.f32 %v411, 1.442695
    %v423 = vpow.pop %v422
    %v424 = vmul.f32 %v412, 1.442695
    %v425 = vpow.pop %v424
    %v426 = vmul.f32 %v413, 1.442695
    %v427 = vpow.pop %v426
    %v428 = vmul.f32 %v414, 1.442695
    %v429 = vpow.pop %v428
    %v430 = vmul.f32 %v415, 1.442695
    %v431 = vpow.pop %v430
    %v432 = vmul.f32 %v392, %v417
    %v433 = vmul.f32 %v393, %v419
    %v434 = vmul.f32 %v394, %v421
    %v435 = vmul.f32 %v395, %v423
    %v436 = vmul.f32 %v396, %v425
    %v437 = vmul.f32 %v397, %v427
    %v438 = vmul.f32 %v398, %v429
    %v439 = vmul.f32 %v399, %v431
    %v440 = vsub.f32 1.0, %v432
    %v441 = vsub.f32 1.0, %v433
    %v442 = vsub.f32 1.0, %v434
    %v443 = vsub.f32 1.0, %v435
    %v444 = vsub.f32 1.0, %v436
    %v445 = vsub.f32 1.0, %v437
    %v446 = vsub.f32 1.0, %v438
    %v447 = vsub.f32 1.0, %v439
    %v448 = vmul.f32 %v242, 0.5
    %v449 = vmul.f32 %v256, 0.5
    %v450 = vmul.f32 %v270, 0.5
    %v451 = vmul.f32 %v284, 0.5
    %v452 = vmul.f32 %v244, 0.5
    %v453 = vmul.f32 %v258, 0.5
    %v454 = vmul.f32 %v272, 0.5
    %v455 = vmul.f32 %v286, 0.5
    %v456 = vmul.f32 %v288, 0.5
    %v457 = vmul.f32 %v289, 0.5
    %v458 = vmul.f32 %v290, 0.5
    %v459 = vmul.f32 %v291, 0.5
    %v460 = vmul.f32 %v292, 0.5
    %v461 = vmul.f32 %v293, 0.5
    %v462 = vmul.f32 %v294, 0.5
    %v463 = vmul.f32 %v295, 0.5
    %v464 = vmul.f32 %v456, %v440
    %v465 = vmul.f32 %v457, %v441
    %v466 = vmul.f32 %v458, %v442
    %v467 = vmul.f32 %v459, %v443
    %v468 = vmul.f32 %v460, %v444
    %v469 = vmul.f32 %v461, %v445
    %v470 = vmul.f32 %v462, %v446
    %v471 = vmul.f32 %v463, %v447
    %v472 = vadd.f32 %v448, %v464
    %v473 = vadd.f32 %v449, %v465
    %v474 = vadd.f32 %v450, %v466
    %v475 = vadd.f32 %v451, %v467
    %v476 = vadd.f32 %v452, %v468
    %v477 = vadd.f32 %v453, %v469
    %v478 = vadd.f32 %v454, %v470
    %v479 = vadd.f32 %v455, %v471
    %v480 = vld [vmem:[#allocation2] sm:$0xff]
    %v481 = vld [vmem:[#allocation2 + $0x8] sm:$0xff]
    %v482 = vpack.c.bf16 %v476, %v472
    %v483 = vpack.c.bf16 %v477, %v473
    %v484 = vpack.c.bf16 %v478, %v474
    %v485 = vpack.c.bf16 %v479, %v475
    %v486 = vld [vmem:[%s3] sm:$0xf]
    %v487 = vld [vmem:[%s3 + $0x4] sm:$0xf]
    %v488 = vld [vmem:[%s3 + $0x8] sm:$0xf]
    %v489 = vld [vmem:[%s3 + $0xc] sm:$0xf]
    %v490 = vld [vmem:[%s3 + $0x10] sm:$0xf]
    %v491 = vld [vmem:[%s3 + $0x14] sm:$0xf]
    %v492 = vld [vmem:[%s3 + $0x18] sm:$0xf]
    %v493 = vld [vmem:[%s3 + $0x1c] sm:$0xf]
    %v494 = vld [vmem:[%s3 + $0x20] sm:$0xf]
    %v495 = vld [vmem:[%s3 + $0x24] sm:$0xf]
    %v496 = vld [vmem:[%s3 + $0x28] sm:$0xf]
    %v497 = vld [vmem:[%s3 + $0x2c] sm:$0xf]
    %v498 = vld [vmem:[%s3 + $0x30] sm:$0xf]
    %v499 = vld [vmem:[%s3 + $0x34] sm:$0xf]
    %v500 = vld [vmem:[%s3 + $0x38] sm:$0xf]
    %v501 = vld [vmem:[%s3 + $0x3c] sm:$0xf]
    %v502 = vld [vmem:[%s3 + $0x40] sm:$0xf]
    %v503 = vld [vmem:[%s3 + $0x44] sm:$0xf]
    %v504 = vld [vmem:[%s3 + $0x48] sm:$0xf]
    %v505 = vld [vmem:[%s3 + $0x4c] sm:$0xf]
    %v506 = vld [vmem:[%s3 + $0x50] sm:$0xf]
    %v507 = vld [vmem:[%s3 + $0x54] sm:$0xf]
    %v508 = vld [vmem:[%s3 + $0x58] sm:$0xf]
    %v509 = vld [vmem:[%s3 + $0x5c] sm:$0xf]
    %v510 = vld [vmem:[%s3 + $0x60] sm:$0xf]
    %v511 = vld [vmem:[%s3 + $0x64] sm:$0xf]
    %v512 = vld [vmem:[%s3 + $0x68] sm:$0xf]
    %v513 = vld [vmem:[%s3 + $0x6c] sm:$0xf]
    %v514 = vld [vmem:[%s3 + $0x70] sm:$0xf]
    %v515 = vld [vmem:[%s3 + $0x74] sm:$0xf]
    %v516 = vld [vmem:[%s3 + $0x78] sm:$0xf]
    %v517 = vld [vmem:[%s3 + $0x7c] sm:$0xf]
    %v518 = vld [vmem:[%s3 + $0x80] sm:$0xf]
    %v519 = vld [vmem:[%s3 + $0x84] sm:$0xf]
    %v520 = vld [vmem:[%s3 + $0x88] sm:$0xf]
    %v521 = vld [vmem:[%s3 + $0x8c] sm:$0xf]
    %v522 = vld [vmem:[%s3 + $0x90] sm:$0xf]
    %v523 = vld [vmem:[%s3 + $0x94] sm:$0xf]
    %v524 = vld [vmem:[%s3 + $0x98] sm:$0xf]
    %v525 = vld [vmem:[%s3 + $0x9c] sm:$0xf]
    %v526 = vld [vmem:[%s3 + $0xa0] sm:$0xf]
    %v527 = vld [vmem:[%s3 + $0xa4] sm:$0xf]
    %v528 = vld [vmem:[%s3 + $0xa8] sm:$0xf]
    %v529 = vld [vmem:[%s3 + $0xac] sm:$0xf]
    %v530 = vld [vmem:[%s3 + $0xb0] sm:$0xf]
    %v531 = vld [vmem:[%s3 + $0xb4] sm:$0xf]
    %v532 = vld [vmem:[%s3 + $0xb8] sm:$0xf]
    %v533 = vld [vmem:[%s3 + $0xbc] sm:$0xf]
    %v534 = vld [vmem:[%s3 + $0xc0] sm:$0xf]
    %v535 = vld [vmem:[%s3 + $0xc4] sm:$0xf]
    %v536 = vld [vmem:[%s3 + $0xc8] sm:$0xf]
    %v537 = vld [vmem:[%s3 + $0xcc] sm:$0xf]
    %v538 = vld [vmem:[%s3 + $0xd0] sm:$0xf]
    %v539 = vld [vmem:[%s3 + $0xd4] sm:$0xf]
    %v540 = vld [vmem:[%s3 + $0xd8] sm:$0xf]
    %v541 = vld [vmem:[%s3 + $0xdc] sm:$0xf]
    %v542 = vld [vmem:[%s3 + $0xe0] sm:$0xf]
    %v543 = vld [vmem:[%s3 + $0xe4] sm:$0xf]
    %v544 = vld [vmem:[%s3 + $0xe8] sm:$0xf]
    %v545 = vld [vmem:[%s3 + $0xec] sm:$0xf]
    %v546 = vld [vmem:[%s3 + $0xf0] sm:$0xf]
    %v547 = vld [vmem:[%s3 + $0xf4] sm:$0xf]
    %v548 = vld [vmem:[%s3 + $0xf8] sm:$0xf]
    %v549 = vld [vmem:[%s3 + $0xfc] sm:$0xf]
    %v614 = vunpack.c.l.b16 %v486
    %v615 = vunpack.c.l.b16 %v487
    %v616 = vunpack.c.l.b16 %v488
    %v617 = vunpack.c.l.b16 %v489
    %v618 = vunpack.c.l.b16 %v490
    %v619 = vunpack.c.l.b16 %v491
    %v620 = vunpack.c.l.b16 %v492
    %v621 = vunpack.c.l.b16 %v493
    %v622 = vunpack.c.l.b16 %v494
    %v623 = vunpack.c.l.b16 %v495
    %v624 = vunpack.c.l.b16 %v496
    %v625 = vunpack.c.l.b16 %v497
    %v626 = vunpack.c.l.b16 %v498
    %v627 = vunpack.c.l.b16 %v499
    %v628 = vunpack.c.l.b16 %v500
    %v629 = vunpack.c.l.b16 %v501
    %v630 = vunpack.c.l.b16 %v502
    %v631 = vunpack.c.l.b16 %v503
    %v632 = vunpack.c.l.b16 %v504
    %v633 = vunpack.c.l.b16 %v505
    %v634 = vunpack.c.l.b16 %v506
    %v635 = vunpack.c.l.b16 %v507
    %v636 = vunpack.c.l.b16 %v508
    %v637 = vunpack.c.l.b16 %v509
    %v638 = vunpack.c.l.b16 %v510
    %v639 = vunpack.c.l.b16 %v511
    %v640 = vunpack.c.l.b16 %v512
    %v641 = vunpack.c.l.b16 %v513
    %v642 = vunpack.c.l.b16 %v514
    %v643 = vunpack.c.l.b16 %v515
    %v644 = vunpack.c.l.b16 %v516
    %v645 = vunpack.c.l.b16 %v517
    %v646 = vunpack.c.l.b16 %v518
    %v647 = vunpack.c.l.b16 %v519
    %v648 = vunpack.c.l.b16 %v520
    %v649 = vunpack.c.l.b16 %v521
    %v650 = vunpack.c.l.b16 %v522
    %v651 = vunpack.c.l.b16 %v523
    %v652 = vunpack.c.l.b16 %v524
    %v653 = vunpack.c.l.b16 %v525
    %v654 = vunpack.c.l.b16 %v526
    %v655 = vunpack.c.l.b16 %v527
    %v656 = vunpack.c.l.b16 %v528
    %v657 = vunpack.c.l.b16 %v529
    %v658 = vunpack.c.l.b16 %v530
    %v659 = vunpack.c.l.b16 %v531
    %v660 = vunpack.c.l.b16 %v532
    %v661 = vunpack.c.l.b16 %v533
    %v662 = vunpack.c.l.b16 %v534
    %v663 = vunpack.c.l.b16 %v535
    %v664 = vunpack.c.l.b16 %v536
    %v665 = vunpack.c.l.b16 %v537
    %v666 = vunpack.c.l.b16 %v538
    %v667 = vunpack.c.l.b16 %v539
    %v668 = vunpack.c.l.b16 %v540
    %v669 = vunpack.c.l.b16 %v541
    %v670 = vunpack.c.l.b16 %v542
    %v671 = vunpack.c.l.b16 %v543
    %v672 = vunpack.c.l.b16 %v544
    %v673 = vunpack.c.l.b16 %v545
    %v674 = vunpack.c.l.b16 %v546
    %v675 = vunpack.c.l.b16 %v547
    %v676 = vunpack.c.l.b16 %v548
    %v677 = vunpack.c.l.b16 %v549
    %v678 = vpack.c.b16 %v615, %v614
    %v679 = vpack.c.b16 %v617, %v616
    %v680 = vpack.c.b16 %v619, %v618
    %v681 = vpack.c.b16 %v621, %v620
    %v682 = vpack.c.b16 %v623, %v622
    %v683 = vpack.c.b16 %v625, %v624
    %v684 = vpack.c.b16 %v627, %v626
    %v685 = vpack.c.b16 %v629, %v628
    %v686 = vpack.c.b16 %v631, %v630
    %v687 = vpack.c.b16 %v633, %v632
    %v688 = vpack.c.b16 %v635, %v634
    %v689 = vpack.c.b16 %v637, %v636
    %v690 = vpack.c.b16 %v639, %v638
    %v691 = vpack.c.b16 %v641, %v640
    %v692 = vpack.c.b16 %v643, %v642
    %v693 = vpack.c.b16 %v645, %v644
    %v694 = vpack.c.b16 %v647, %v646
    %v695 = vpack.c.b16 %v649, %v648
    %v696 = vpack.c.b16 %v651, %v650
    %v697 = vpack.c.b16 %v653, %v652
    %v698 = vpack.c.b16 %v655, %v654
    %v699 = vpack.c.b16 %v657, %v656
    %v700 = vpack.c.b16 %v659, %v658
    %v701 = vpack.c.b16 %v661, %v660
    %v702 = vpack.c.b16 %v663, %v662
    %v703 = vpack.c.b16 %v665, %v664
    %v704 = vpack.c.b16 %v667, %v666
    %v705 = vpack.c.b16 %v669, %v668
    %v706 = vpack.c.b16 %v671, %v670
    %v707 = vpack.c.b16 %v673, %v672
    %v708 = vpack.c.b16 %v675, %v674
    %v709 = vpack.c.b16 %v677, %v676
    %742 = vmatpush.bf16.msra.mxu0 %v685
    %743 = vmatpush.bf16.msra.mxu0 %v684
    %744 = vmatpush.bf16.msra.mxu0 %v683
    %745 = vmatpush.bf16.msra.mxu0 %v682
    %746 = vmatpush.bf16.msra.mxu0 %v681
    %747 = vmatpush.bf16.msra.mxu0 %v680
    %748 = vmatpush.bf16.msra.mxu0 %v679
    %749 = vmatpush.bf16.msra.mxu0 %v678
    %750 = vmatmul.bf16.gmra.mxu0 %v482
    %v751 = vpop.f32.mrf.mxu0
    %v752 = vadd.f32 0.0, %v751
    %v753 = vpop.f32.mrf.mxu0
    %v754 = vadd.f32 0.0, %v753
    %755 = vdwg.mxu0
    %756 = vmatpush.bf16.msra.mxu0 %v693
    %757 = vmatpush.bf16.msra.mxu0 %v692
    %758 = vmatpush.bf16.msra.mxu0 %v691
    %759 = vmatpush.bf16.msra.mxu0 %v690
    %760 = vmatpush.bf16.msra.mxu0 %v689
    %761 = vmatpush.bf16.msra.mxu0 %v688
    %762 = vmatpush.bf16.msra.mxu0 %v687
    %763 = vmatpush.bf16.msra.mxu0 %v686
    %764 = vmatmul.bf16.gmra.mxu0 %v483
    %v765 = vpop.f32.mrf.mxu0
    %v766 = vadd.f32 %v752, %v765
    %v767 = vpop.f32.mrf.mxu0
    %v768 = vadd.f32 %v754, %v767
    %769 = vdwg.mxu0
    %770 = vmatpush.bf16.msra.mxu0 %v701
    %771 = vmatpush.bf16.msra.mxu0 %v700
    %772 = vmatpush.bf16.msra.mxu0 %v699
    %773 = vmatpush.bf16.msra.mxu0 %v698
    %774 = vmatpush.bf16.msra.mxu0 %v697
    %775 = vmatpush.bf16.msra.mxu0 %v696
    %776 = vmatpush.bf16.msra.mxu0 %v695
    %777 = vmatpush.bf16.msra.mxu0 %v694
    %778 = vmatmul.bf16.gmra.mxu0 %v484
    %v779 = vpop.f32.mrf.mxu0
    %v780 = vadd.f32 %v766, %v779
    %v781 = vpop.f32.mrf.mxu0
    %v782 = vadd.f32 %v768, %v781
    %783 = vdwg.mxu0
    %784 = vmatpush.bf16.msra.mxu0 %v709
    %785 = vmatpush.bf16.msra.mxu0 %v708
    %786 = vmatpush.bf16.msra.mxu0 %v707
    %787 = vmatpush.bf16.msra.mxu0 %v706
    %788 = vmatpush.bf16.msra.mxu0 %v705
    %789 = vmatpush.bf16.msra.mxu0 %v704
    %790 = vmatpush.bf16.msra.mxu0 %v703
    %791 = vmatpush.bf16.msra.mxu0 %v702
    %792 = vmatmul.bf16.gmra.mxu0 %v485
    %v793 = vpop.f32.mrf.mxu0
    %v794 = vadd.f32 %v780, %v793
    %v795 = vpop.f32.mrf.mxu0
    %v796 = vadd.f32 %v782, %v795
    %797 = vdwg.mxu0
    %v798 = vadd.f32 %v480, %v794
    %v799 = vadd.f32 %v481, %v796
    %800 = vst [vmem:[#allocation2] sm:$0xff] %v798
    %801 = vst [vmem:[#allocation2 + $0x8] sm:$0xff] %v799
    // Predicated region
    $region26: #{mlp_pallas.1} parent=1 // pred_check
      %p802 = pneg %p21
    $region27: #{mlp_pallas.1} parent=1 // pred_check_branch
      %804 = sbr.rel (%p802) target = $region29
    $region28: #{mlp_pallas.1} parent=1 // pred_region
      %v805 = vld [vmem:[#allocation2] sm:$0xff]
      %v806 = vld [vmem:[#allocation2 + $0x8] sm:$0xff]
      %v807 = vld [vmem:[%s4] sm:$0x1]
      %v809 = vperm.slane %v807, 0
      %v811 = vadd.f32 %v805, %v809
      %v812 = vadd.f32 %v806, %v809
      %813 = vst [vmem:[#allocation3] sm:$0xff] %v811
      %814 = vst [vmem:[#allocation3 + $0x8] sm:$0xff] %v812
    $region29: #{mlp_pallas.1} parent=1 // pred_fallthru
      _
    // Predicated region
    $region30: #{mlp_pallas.1} parent=1 // pred_check
      _
    $region31: #{mlp_pallas.1} parent=1 // pred_check_branch
      %816 = sbr.rel (0) target = $region33
    $region32: #{mlp_pallas.1} parent=1 // pred_region
      %818 = vsyncadd [#allocation4], 0
      %s819 = sshll.u32 [#allocation3], 4
      %s820 = int_to_ptr.vmem [resolvable:$true] %s819
      %s821 = sshll.u32 %s5, 4
      %s822 = int_to_ptr.hbm [resolvable:$true] %s821
      %827 = dma.vmem_to_hbm [thread:$0]  %s820, 256, %s822, [#allocation4], 128, 128, 8
    $region33: #{mlp_pallas.1} parent=1 // pred_fallthru
      _
    // Predicated region
    $region34: #{mlp_pallas.1} parent=1 // pred_check
      _
    $region35: #{mlp_pallas.1} parent=1 // pred_check_branch
      %829 = sbr.rel (0) target = $region37
    $region36: #{mlp_pallas.1} parent=1 // pred_region
      %831 = dma.done [#allocation4], 256
    $region37: #{mlp_pallas.1} parent=1 // pred_fallthru
      _
    %832 = vsyncpa [#allocation4], 1

</llo_original>
